<compile_context>
chip_gen: v5e
topology: v5e:2x2
jax: 0.10.0
libtpu: 0.0.40
codegen_flags: <defaults>
</compile_context>

<pallas_src>
import jax
import jax.numpy as jnp
from jax import lax
from jax.experimental import pallas as pl
from jax.experimental.pallas import tpu as pltpu

EMA_ALPHA = 0.9
W_CLS = 0.7
W_REG = 0.3


def _ema_update_kernel(in_ref, out_ref):
    # in_ref : SMEM f32[4] = [loss_cls, loss_reg, log_var_cls, log_var_reg]
    # out_ref: SMEM f32[2] = [new_log_var_cls, new_log_var_reg]
    out_ref[0] = EMA_ALPHA * in_ref[2] + (1.0 - EMA_ALPHA) * in_ref[0]
    out_ref[1] = EMA_ALPHA * in_ref[3] + (1.0 - EMA_ALPHA) * in_ref[1]


_smem_spec = pl.BlockSpec(memory_space=pltpu.SMEM)

_ema_pallas = pl.pallas_call(
    _ema_update_kernel,
    out_shape=jax.ShapeDtypeStruct((2,), jnp.float32),
    in_specs=[_smem_spec],
    out_specs=_smem_spec,
    cost_estimate=pl.CostEstimate(flops=4, transcendentals=0, bytes_accessed=24),
)


@jax.jit
def multitask_loss(loss_cls, loss_reg, log_var_cls, log_var_reg):
    """Pallas-backed forward of MultiTaskLoss.

    Args:
      loss_cls, loss_reg: scalar (0-dim) float losses.
      log_var_cls, log_var_reg: scalar (0-dim) float parameter/buffer state.

    Returns:
      (total_loss, new_log_var_cls, new_log_var_reg) as 0-dim float32 arrays.
      total_loss is differentiable w.r.t. the losses (0.7 / 0.3);
      new_log_var_* carry no gradient (torch.no_grad / .detach semantics).
    """
    lc = jnp.asarray(loss_cls, jnp.float32).reshape(())
    lr = jnp.asarray(loss_reg, jnp.float32).reshape(())
    lvc = jnp.asarray(log_var_cls, jnp.float32).reshape(())
    lvr = jnp.asarray(log_var_reg, jnp.float32).reshape(())

    # Differentiable weighted total loss: plain jnp so XLA fuses it upstream
    # and gradients flow exactly like the PyTorch module.
    total = W_CLS * lc + W_REG * lr

    # Gradient-free EMA update of the log-variance buffers (the
    # torch.no_grad() block) — done in the Pallas kernel on detached values.
    packed = lax.stop_gradient(jnp.stack([lc, lr, lvc, lvr]))
    new_lv = _ema_pallas(packed)
    return total, new_lv[0], new_lv[1]


if __name__ == "__main__":
    key = jax.random.PRNGKey(0)
    k1, k2 = jax.random.split(key)

    # Deterministic parameter init, matching nn.Parameter(torch.zeros(())).
    log_var_cls = jnp.zeros((), jnp.float32)
    log_var_reg = jnp.zeros((), jnp.float32)

    # Small synthetic scalar losses (positive, like typical loss values).
    loss_cls = jnp.abs(jax.random.normal(k1, (), jnp.float32))
    loss_reg = jnp.abs(jax.random.normal(k2, (), jnp.float32))

    total, new_lv_cls, new_lv_reg = multitask_loss(
        loss_cls, loss_reg, log_var_cls, log_var_reg)
    jax.block_until_ready((total, new_lv_cls, new_lv_reg))

    # Forward-value reference check in plain JAX.
    ref_total = W_CLS * loss_cls + W_REG * loss_reg
    ref_cls = EMA_ALPHA * log_var_cls + (1.0 - EMA_ALPHA) * loss_cls
    ref_reg = EMA_ALPHA * log_var_reg + (1.0 - EMA_ALPHA) * loss_reg
    assert jnp.allclose(total, ref_total, rtol=1e-6, atol=1e-6)
    assert jnp.allclose(new_lv_cls, ref_cls, rtol=1e-6, atol=1e-6)
    assert jnp.allclose(new_lv_reg, ref_reg, rtol=1e-6, atol=1e-6)

    # Gradient check: total must be differentiable w.r.t. the losses with
    # constant weights 0.7 / 0.3 (PyTorch semantics), despite the pallas_call.
    g_cls, g_reg = jax.grad(
        lambda a, b: multitask_loss(a, b, log_var_cls, log_var_reg)[0],
        argnums=(0, 1))(loss_cls, loss_reg)
    jax.block_until_ready((g_cls, g_reg))
    assert jnp.allclose(g_cls, W_CLS, rtol=1e-6, atol=1e-6)
    assert jnp.allclose(g_reg, W_REG, rtol=1e-6, atol=1e-6)

    print("KERNEL_OK")
</pallas_src>

<mosaic_0001>
module attributes {stable_mosaic.version = 11 : i64} {
  func.func @_ema_update_kernel(%arg0: memref<4xf32, #tpu.memory_space<smem>>, %arg1: memref<2xf32, #tpu.memory_space<smem>>) attributes {dimension_semantics = [], scalar_prefetch = 0 : i64, scratch_operands = 0 : i64, tpu.core_type = #tpu.core_type<tc>} {
    %c2 = arith.constant 2 : index
    %0 = memref.load %arg0[%c2] : memref<4xf32, #tpu.memory_space<smem>>
    %cst = arith.constant 0.899999976 : f32
    %1 = arith.mulf %cst, %0 : f32
    %c0 = arith.constant 0 : index
    %2 = memref.load %arg0[%c0] : memref<4xf32, #tpu.memory_space<smem>>
    %cst_0 = arith.constant 1.000000e-01 : f32
    %3 = arith.mulf %cst_0, %2 : f32
    %4 = arith.addf %1, %3 : f32
    %c0_1 = arith.constant 0 : index
    %5 = memref.load %arg1[%c0_1] : memref<2xf32, #tpu.memory_space<smem>>
    memref.store %4, %arg1[%c0_1] : memref<2xf32, #tpu.memory_space<smem>>
    %c3 = arith.constant 3 : index
    %6 = memref.load %arg0[%c3] : memref<4xf32, #tpu.memory_space<smem>>
    %cst_2 = arith.constant 0.899999976 : f32
    %7 = arith.mulf %cst_2, %6 : f32
    %c1 = arith.constant 1 : index
    %8 = memref.load %arg0[%c1] : memref<4xf32, #tpu.memory_space<smem>>
    %cst_3 = arith.constant 1.000000e-01 : f32
    %9 = arith.mulf %cst_3, %8 : f32
    %10 = arith.addf %7, %9 : f32
    %c1_4 = arith.constant 1 : index
    %11 = memref.load %arg1[%c1_4] : memref<2xf32, #tpu.memory_space<smem>>
    memref.store %10, %arg1[%c1_4] : memref<2xf32, #tpu.memory_space<smem>>
    return
  }
}

</mosaic_0001>

<llo_original>
// kernel: multitask_loss.1
$region0: #{multitask_loss.1}
  #allocation0 [shape = 'u32[]', space=smem, size = 0x4, offset = 0x4, fixed_abs, tag = 'smem constant byte address 0x4 - core index']
  #allocation1 [shape = 'u32[72,128]{1,0:T(1,128)}', space=vmem, size = 0x9000, scoped, tag = 'internal scratch']
  %s0 = inlined_call_operand.vmem [shape: f32[4], index: 0, kind: input, shape index: {}]
  %s1 = inlined_call_operand.vmem [shape: f32[2], index: 1, kind: output, shape index: {}]
  %s2 = sld [smem:[#allocation0]]
  $region18: #{multitask_loss.1} parent=0
    _
  %s4 = ssub.s32 1, %s2
  %s5 = scalar_select 0, %s4, %s2
  $region1: #{multitask_loss.1} parent=0
    #allocation2 [shape = 'u8[512]{0}', space=smem, size = 0x200, scoped, tag = 'input window, operand 0, single buffered']
    #allocation3 [shape = 's32[1]{0}', space=sflag, size = 0x4, scoped, tag = 'scoped memory for multitask_loss.1']
    #allocation4 [shape = 's32[1]{0}', space=sflag, size = 0x4, scoped, tag = 'scoped memory for multitask_loss.1']
    #allocation5 [shape = 'u8[512]{0}', space=smem, size = 0x200, scoped, tag = 'output window, operand 0, single buffered']
    %6 = vsyncpa [#allocation3], 0
    %7 = vsyncpa [#allocation4], 0
    // Predicated region
    $region2: #{multitask_loss.1} parent=1 // pred_check
      _
    $region3: #{multitask_loss.1} parent=1 // pred_check_branch
      %9 = sbr.rel (0) target = $region5
    $region4: #{multitask_loss.1} parent=1 // pred_region
      %11 = vsyncadd [#allocation3], 0
      %s13 = sshll.u32 %s0, 4
      %s14 = int_to_ptr.vmem [resolvable:$true] %s13
      %16 = dma.vmem_to_smem %s14, 16, [#allocation2], [#allocation3]
    $region5: #{multitask_loss.1} parent=1 // pred_fallthru
      _
    // Predicated region
    $region6: #{multitask_loss.1} parent=1 // pred_check
      _
    $region7: #{multitask_loss.1} parent=1 // pred_check_branch
      %18 = sbr.rel (0) target = $region9
    $region8: #{multitask_loss.1} parent=1 // pred_region
      %20 = dma.done [#allocation3], 16
    $region9: #{multitask_loss.1} parent=1 // pred_fallthru
      _
    %21 = sfence
    %s22 = sld [smem:[#allocation2 + $0x2]]
    %s23 = smul.f32 %s22, 0.9
    %s24 = sld [smem:[#allocation2]]
    %s25 = smul.f32 %s24, 0.1
    %s26 = sadd.f32 %s23, %s25
    %s27 = scalar_lea.smem [#allocation5], 0
    %28 = sst [smem:[%s27]] %s26
    %s29 = sld [smem:[#allocation2 + $0x3]]
    %s30 = smul.f32 %s29, 0.9
    %s31 = sld [smem:[#allocation2 + $0x1]]
    %s32 = smul.f32 %s31, 0.1
    %s33 = sadd.f32 %s30, %s32
    %s34 = scalar_lea.smem [#allocation5], 1
    %35 = sst [smem:[%s34]] %s33
    // Predicated region
    $region10: #{multitask_loss.1} parent=1 // pred_check
      _
    $region11: #{multitask_loss.1} parent=1 // pred_check_branch
      %37 = sbr.rel (0) target = $region13
    $region12: #{multitask_loss.1} parent=1 // pred_region
      %39 = vsyncadd [#allocation4], 0
      %s41 = sshll.u32 %s1, 4
      %s42 = int_to_ptr.vmem [resolvable:$true] %s41
      %44 = dma.smem_to_vmem [#allocation5], 16, %s42, [#allocation4]
    $region13: #{multitask_loss.1} parent=1 // pred_fallthru
      _
    // Predicated region
    $region14: #{multitask_loss.1} parent=1 // pred_check
      _
    $region15: #{multitask_loss.1} parent=1 // pred_check_branch
      %46 = sbr.rel (0) target = $region17
    $region16: #{multitask_loss.1} parent=1 // pred_region
      %48 = dma.done [#allocation4], 16
    $region17: #{multitask_loss.1} parent=1 // pred_fallthru
      _
    %49 = sfence
    %50 = vsyncpa [#allocation3], 1
    %51 = vsyncpa [#allocation4], 1

</llo_original>
